<compile_context>
chip_gen: v6e
topology: v6e:2x2x1
jax: 0.10.0
libtpu: 0.0.40
codegen_flags: <defaults>
</compile_context>

<pallas_src>
import functools
import math

import jax
import jax.numpy as jnp
from jax import lax
from jax.experimental import pallas as pl
from jax.experimental.pallas import tpu as pltpu

METHODS = ('fc-relu', 'dot', 'cosine', 'neg-dist', 'exp-neg-dist', 'inv-dist', 'neglog-dist')
# NOTE: 'cosine' is listed in METHODS but has no branch in the PyTorch forward(),
# so it is not implemented here either (matches reference behavior).
# TODO(synk): implement 'cosine' if/when the reference module defines it.

_MASK_VALUE = -1e30     # finite "-inf" for masking padded prototypes before softmax


def _round_up(a, b):
    return (a + b - 1) // b * b


def _masked_softmax(score, valid):
    """Numerically-stable softmax over axis=1; padded columns get zero weight."""
    if valid is not None:
        score = jnp.where(valid, score, _MASK_VALUE)
    m = jnp.max(score, axis=1, keepdims=True)
    e = jnp.exp(score - m)
    return e * pl.reciprocal(jnp.sum(e, axis=1, keepdims=True), approx=True)


def _pow_dist(d2, power):
    """Computes sqrt(d2) ** power, avoiding sqrt/pow where possible."""
    if isinstance(power, int) and power > 0:
        if power % 2 == 0:
            base, n = d2, power // 2      # (sqrt(d2))**(2m) == d2**m
        else:
            base, n = jnp.sqrt(d2), power
        out = base
        for _ in range(n - 1):
            out = out * base
        return out
    return jnp.sqrt(d2) ** power          # generic float power


def _make_kernel(method, eps, power, n_protos, p_pad, keys_resident, mxu_dtype):
    """Kernel: x[TB,TD], kk[1,Pp], keys[(nk|1),Pp,TD], values[Pp,Cp] -> o[TB,Cp]."""
    if method == 'cosine':
        raise NotImplementedError("'cosine' has no branch in the reference forward()")

    neg_dist_fast = (method == 'neg-dist' and isinstance(power, int) and power == 2)
    need_xx = method in ('exp-neg-dist', 'inv-dist', 'neglog-dist') or (
        method == 'neg-dist' and not neg_dist_fast)

    def kernel(x_ref, kk_ref, k_ref, v_ref, o_ref, acc_ref, xx_ref):
        kstep = pl.program_id(1)
        nk = pl.num_programs(1)

        @pl.when(kstep == 0)
        def _init():
            acc_ref[...] = jnp.zeros_like(acc_ref)
            if need_xx:
                xx_ref[...] = jnp.zeros_like(xx_ref)

        x = x_ref[...]                               # [TB, TD] native dtype
        if keys_resident:
            k = k_ref[kstep]                         # resident keys, one D chunk
        else:
            k = k_ref[0]                             # streamed (1, Pp, TD) block
        # x @ keys.T for this D chunk, bf16 operands, f32 accumulation.
        acc_ref[...] += lax.dot_general(
            x.astype(mxu_dtype), k.astype(mxu_dtype),
            (((1,), (1,)), ((), ())),
            preferred_element_type=jnp.float32)      # [TB, Pp]

        if need_xx:
            xf = x.astype(jnp.float32)
            xx_ref[...] += jnp.sum(xf * xf, axis=1, keepdims=True)

        @pl.when(kstep == nk - 1)
        def _finalize():
            xkT = acc_ref[...]                       # [TB, Pp] f32
            tb = xkT.shape[0]
            if p_pad > n_protos:
                valid = lax.broadcasted_iota(jnp.int32, (tb, p_pad), 1) < n_protos
            else:
                valid = None

            if method == 'fc-relu':
                attn = jnp.maximum(xkT, 0.0)
                if valid is not None:
                    attn = jnp.where(valid, attn, 0.0)
            elif method == 'dot':
                scaling = jnp.float32(math.sqrt(1.0 / n_protos))
                attn = _masked_softmax(scaling * xkT, valid)
            elif neg_dist_fast:
                # softmax(-(xx + kk - 2 xkT)) == softmax(2 xkT - kk): xx cancels.
                kk = kk_ref[...]                     # [1, Pp] f32
                attn = _masked_softmax(2.0 * xkT - kk, valid)
            else:
                kk = kk_ref[...]                     # [1, Pp] f32
                xx = xx_ref[...]                     # [TB, 1] f32
                d2 = jnp.maximum(xx + kk - 2.0 * xkT, 0.0)
                distp = _pow_dist(d2, power)
                if method == 'neglog-dist':
                    inv = 1.0 / (jnp.float32(eps) + distp)   # exact: feeds output
                    if valid is not None:
                        inv = jnp.where(valid, inv, 0.0)
                    attn = inv * pl.reciprocal(
                        jnp.sum(inv, axis=1, keepdims=True), approx=True)
                elif method == 'inv-dist':
                    attn = _masked_softmax(
                        pl.reciprocal(jnp.float32(eps) + distp, approx=True), valid)
                elif method == 'exp-neg-dist':
                    attn = _masked_softmax(jnp.exp(-0.5 * distp), valid)
                elif method == 'neg-dist':
                    attn = _masked_softmax(-distp, valid)
                else:
                    raise ValueError(f"method {method!r} not implemented in forward()")

            v = v_ref[...]                           # [Pp, Cp] native dtype
            o_ref[...] = jnp.dot(
                attn.astype(mxu_dtype), v.astype(mxu_dtype),
                preferred_element_type=jnp.float32).astype(o_ref.dtype)

    return kernel


@functools.partial(jax.jit, static_argnames=('method', 'eps', 'power', 'mxu_dtype'))
def simple_two_layer_net(inputs, keys, values, *, method, eps=0.001, power=2,
                         mxu_dtype=jnp.bfloat16):
    """JAX/Pallas equivalent of SimpleTwoLayerNet.forward."""
    assert method in METHODS
    B = inputs.shape[0]
    x = inputs.reshape(B, -1)                        # [B, D] native dtype
    k = keys.reshape(keys.shape[0], -1)              # [P, D]
    v = values                                       # [P, C]
    P, C = v.shape
    D = x.shape[1]

    # Per-prototype squared norms, hoisted (keys are fixed parameters), f32.
    kf = k.astype(jnp.float32)
    kk = jnp.sum(kf * kf, axis=1)[None, :]           # [1, P]

    # ---- padded / tiled geometry -------------------------------------------
    P_pad = _round_up(P, 128)                        # lane-dense prototype axis
    C_pad = _round_up(C, 128)                        # lane-dense class axis
    TD = min(_round_up(D, 128), 512)                 # contraction tile
    D_pad = _round_up(D, TD)
    nk = D_pad // TD

    # Batch tile: sublane-aligned; aim for >= 2 grid steps when B allows it so
    # both TensorCores get work on multi-TC parts (v7x).
    sub = 8 if jnp.dtype(x.dtype).itemsize >= 4 else 16
    B_sub = _round_up(B, sub)
    if B_sub // sub >= 2:
        TB = min(_round_up(max(B_sub // 2, sub), sub), 512)
    else:
        TB = B_sub
    B_pad = _round_up(B_sub, TB)

    # ---- pad operands (zeros are neutral for dot / norms) -------------------
    x = jnp.pad(x, ((0, B_pad - B), (0, D_pad - D)))
    k = jnp.pad(k, ((0, P_pad - P), (0, D_pad - D)))
    v = jnp.pad(v, ((0, P_pad - P), (0, C_pad - C)))
    kk = jnp.pad(kk, ((0, 0), (0, P_pad - P)))

    # Split keys into D chunks: [nk, P_pad, TD]; lets the kernel index one chunk
    # per reduction step whether the whole thing is resident or streamed.
    k3 = k.reshape(P_pad, nk, TD).transpose(1, 0, 2)

    k_itemsize = jnp.dtype(k.dtype).itemsize
    keys_resident = (nk * P_pad * TD * k_itemsize) <= 4 * 1024 * 1024
    if keys_resident:
        # Constant index_map -> keys are DMA'd into VMEM exactly once.
        k_spec = pl.BlockSpec((nk, P_pad, TD), lambda i, j: (0, 0, 0))
    else:
        # Stream one D chunk per reduction step.
        k_spec = pl.BlockSpec((1, P_pad, TD), lambda i, j: (j, 0, 0))

    # ---- VMEM budget (explicit: v5e scoped default is only 16 MiB) ----------
    x_itemsize = jnp.dtype(x.dtype).itemsize
    v_itemsize = jnp.dtype(v.dtype).itemsize
    keys_block_elems = (nk * P_pad * TD) if keys_resident else (P_pad * TD)
    est = (2 * TB * TD * x_itemsize            # x tile (double-buffered)
           + 2 * keys_block_elems * k_itemsize  # keys block(s)
           + 2 * P_pad * 4                      # kk
           + 2 * P_pad * C_pad * v_itemsize     # values
           + 2 * TB * C_pad * 4                 # output tile
           + TB * P_pad * 4                     # acc scratch
           + TB * 128 * 4)                      # xx scratch (lane-padded)
    vmem_limit = int(min(64 * 1024 * 1024, max(32 * 1024 * 1024, 2 * est)))

    kernel = _make_kernel(method, eps, power, P, P_pad, keys_resident, mxu_dtype)

    logits = pl.pallas_call(
        kernel,
        out_shape=jax.ShapeDtypeStruct((B_pad, C_pad), jnp.float32),
        grid=(B_pad // TB, nk),
        in_specs=[
            pl.BlockSpec((TB, TD), lambda i, j: (i, j)),      # x: streamed tiles
            pl.BlockSpec((1, P_pad), lambda i, j: (0, 0)),    # kk: resident
            k_spec,                                           # keys
            pl.BlockSpec((P_pad, C_pad), lambda i, j: (0, 0)),  # values: resident
        ],
        out_specs=pl.BlockSpec((TB, C_pad), lambda i, j: (i, 0)),
        scratch_shapes=[
            pltpu.VMEM((TB, P_pad), jnp.float32),   # x @ keys.T accumulator
            pltpu.VMEM((TB, 1), jnp.float32),       # row norms accumulator
        ],
        compiler_params=pltpu.CompilerParams(
            dimension_semantics=("parallel", "arbitrary"),
            vmem_limit_bytes=vmem_limit),
    )(x, kk, k3, v)
    return logits[:B, :C]


def _reference(inputs, keys, values, method, eps=0.001, power=2, mxu_dtype=None):
    """Pure-JAX reference mirroring the PyTorch forward().

    If mxu_dtype is given, matmul operands are rounded to that dtype with f32
    accumulation (matching the kernel's MXU numerics); all other math is f32.
    """
    x = inputs.reshape(inputs.shape[0], -1).astype(jnp.float32)
    k = keys.reshape(keys.shape[0], -1).astype(jnp.float32)
    v = values.astype(jnp.float32)

    def mm(a, b):
        if mxu_dtype is not None:
            a = a.astype(mxu_dtype)
            b = b.astype(mxu_dtype)
        return jnp.dot(a, b, preferred_element_type=jnp.float32)

    xkT = mm(x, k.T)
    if method == 'fc-relu':
        return mm(jnp.maximum(xkT, 0.0), v)
    if method == 'dot':
        return mm(jax.nn.softmax(math.sqrt(1.0 / k.shape[0]) * xkT, axis=1), v)
    d2 = jnp.maximum(
        jnp.sum(x * x, axis=1, keepdims=True)
        + jnp.sum(k * k, axis=1)[None, :] - 2.0 * xkT, 0.0)
    distp = jnp.sqrt(d2) ** power
    if method == 'neglog-dist':
        a = 1.0 / (eps + distp)
        return mm(a / jnp.sum(a, axis=1, keepdims=True), v)
    if method == 'inv-dist':
        return mm(jax.nn.softmax(1.0 / (eps + distp), axis=1), v)
    if method == 'exp-neg-dist':
        return mm(jax.nn.softmax(jnp.exp(-0.5 * distp), axis=1), v)
    if method == 'neg-dist':
        return mm(jax.nn.softmax(-distp, axis=1), v)
    raise ValueError(method)


if __name__ == "__main__":
    # Module config (small, consistent with the reference forward):
    batch = 2
    input_shape = (4, 16, 16)     # (C, H, W) -> D = 1024
    n_classes = 8
    n_protos = 32

    key = jax.random.PRNGKey(0)
    k_in, k_keys, k_vals = jax.random.split(key, 3)

    # Deterministic synthetic parameters (module __init__ uses zeros; zeros are
    # degenerate for the distance methods, so use a fixed random init instead).
    x = jax.random.normal(k_in, (batch,) + input_shape, dtype=jnp.float32)
    keys_param = jax.random.normal(k_keys, (n_protos,) + input_shape, dtype=jnp.float32)
    values_param = jax.random.normal(k_vals, (n_protos, n_classes), dtype=jnp.float32)

    for method in ('fc-relu', 'dot', 'neg-dist', 'exp-neg-dist', 'inv-dist', 'neglog-dist'):
        out = simple_two_layer_net(x, keys_param, values_param, method=method)
        out = jax.block_until_ready(out)
        assert out.shape == (batch, n_classes), (method, out.shape)
        assert bool(jnp.all(jnp.isfinite(out))), method

        # Check against a pure-JAX reference with matched MXU numerics
        # (bf16 matmul operands, f32 accumulation, f32 elementwise math).
        ref = _reference(x, keys_param, values_param, method, mxu_dtype=jnp.bfloat16)
        scale = float(jnp.max(jnp.abs(ref))) + 1e-6
        err = float(jnp.max(jnp.abs(out - ref)))
        assert err <= 5e-2 * scale, (method, err, scale)

    print("KERNEL_OK")
</pallas_src>

<mosaic_0001>
module attributes {stable_mosaic.version = 11 : i64} {
  func.func @kernel(%arg0: i32, %arg1: i32, %arg2: memref<8x512xf32, #tpu.memory_space<vmem>>, %arg3: memref<1x128xf32, #tpu.memory_space<vmem>>, %arg4: memref<2x128x512xf32, #tpu.memory_space<vmem>>, %arg5: memref<128x128xf32, #tpu.memory_space<vmem>>, %arg6: memref<8x128xf32, #tpu.memory_space<vmem>>, %arg7: memref<8x128xf32, #tpu.memory_space<vmem>>, %arg8: memref<8x1xf32, #tpu.memory_space<vmem>>) attributes {dimension_semantics = [#tpu.dimension_semantics<parallel>, #tpu.dimension_semantics<arbitrary>], iteration_bounds = array<i64: 1, 2>, scalar_prefetch = 0 : i64, scratch_operands = 2 : i64, tpu.core_type = #tpu.core_type<tc>, window_params = [{transform_indices = @transform_0, window_bounds = array<i64: 8, 512>}, {pipeline_mode = #tpu.pipeline_mode<synchronous>, transform_indices = @transform_1, window_bounds = array<i64: 1, 128>}, {pipeline_mode = #tpu.pipeline_mode<synchronous>, transform_indices = @transform_2, window_bounds = array<i64: 2, 128, 512>}, {pipeline_mode = #tpu.pipeline_mode<synchronous>, transform_indices = @transform_3, window_bounds = array<i64: 128, 128>}, {transform_indices = @transform_4, window_bounds = array<i64: 8, 128>}]} {
    %c0_i32 = arith.constant 0 : i32
    %0 = arith.cmpi eq, %arg1, %c0_i32 : i32
    %1 = arith.extui %0 : i1 to i32
    %c0_i32_0 = arith.constant 0 : i32
    %2 = arith.cmpi ne, %1, %c0_i32_0 : i32
    scf.if %2 {
      %cst_9 = arith.constant 0.000000e+00 : f32
      %16 = vector.broadcast %cst_9 : f32 to vector<8x128xf32>
      %c0_10 = arith.constant 0 : index
      %c0_11 = arith.constant 0 : index
      %17 = vector.load %arg7[%c0_10, %c0_11] : memref<8x128xf32, #tpu.memory_space<vmem>>, vector<8x128xf32>
      tpu.vector_store %arg7[%c0_10, %c0_11], %16 {strides = array<i32>} : memref<8x128xf32, #tpu.memory_space<vmem>>, vector<8x128xf32>,
    } else {
    }
    %c0 = arith.constant 0 : index
    %c0_1 = arith.constant 0 : index
    %3 = vector.load %arg2[%c0, %c0_1] : memref<8x512xf32, #tpu.memory_space<vmem>>, vector<8x512xf32>
    %4 = arith.index_cast %arg1 : i32 to index
    %c0_2 = arith.constant 0 : index
    %c0_3 = arith.constant 0 : index
    %5 = vector.load %arg4[%4, %c0_2, %c0_3] : memref<2x128x512xf32, #tpu.memory_space<vmem>>, vector<1x128x512xf32>
    %6 = vector.shape_cast %5 : vector<1x128x512xf32> to vector<128x512xf32>
    %c0_4 = arith.constant 0 : index
    %c0_5 = arith.constant 0 : index
    %7 = vector.load %arg7[%c0_4, %c0_5] : memref<8x128xf32, #tpu.memory_space<vmem>>, vector<8x128xf32>
    %8 = arith.truncf %3 : vector<8x512xf32> to vector<8x512xbf16>
    %9 = arith.truncf %6 : vector<128x512xf32> to vector<128x512xbf16>
    %cst = arith.constant dense<0.000000e+00> : vector<8x128xf32>
    %10 = tpu.matmul %8, %9, %cst {dimension_numbers = #tpu.dot_dimension_numbers<[1], [1], [0], [0], [0, 0, 1, 0], [], []>} : vector<8x512xbf16>, vector<128x512xbf16>, vector<8x128xf32> -> vector<8x128xf32>
    %11 = arith.addf %7, %10 : vector<8x128xf32>
    %c0_6 = arith.constant 0 : index
    %c0_7 = arith.constant 0 : index
    %12 = vector.load %arg7[%c0_6, %c0_7] : memref<8x128xf32, #tpu.memory_space<vmem>>, vector<8x128xf32>
    tpu.vector_store %arg7[%c0_6, %c0_7], %11 {strides = array<i32>} : memref<8x128xf32, #tpu.memory_space<vmem>>, vector<8x128xf32>,
    %c1_i32 = arith.constant 1 : i32
    %13 = arith.cmpi eq, %arg1, %c1_i32 : i32
    %14 = arith.extui %13 : i1 to i32
    %c0_i32_8 = arith.constant 0 : i32
    %15 = arith.cmpi ne, %14, %c0_i32_8 : i32
    scf.if %15 {
      %c0_9 = arith.constant 0 : index
      %c0_10 = arith.constant 0 : index
      %16 = vector.load %arg7[%c0_9, %c0_10] : memref<8x128xf32, #tpu.memory_space<vmem>>, vector<8x128xf32>
      %17 = tpu.iota {dimensions = array<i32: 1>} : vector<8x128xi32>
      %c32_i32 = arith.constant 32 : i32
      %18 = vector.broadcast %c32_i32 : i32 to vector<8x128xi32>
      %19 = arith.cmpi slt, %17, %18 : vector<8x128xi32>
      %cst_11 = arith.constant 0.000000e+00 : f32
      %20 = vector.broadcast %cst_11 : f32 to vector<8x128xf32>
      %21 = arith.maximumf %16, %20 : vector<8x128xf32>
      %cst_12 = arith.constant 0.000000e+00 : f32
      %22 = vector.broadcast %cst_12 : f32 to vector<8x128xf32>
      %23 = arith.select %19, %21, %22 : vector<8x128xi1>, vector<8x128xf32>
      %c0_13 = arith.constant 0 : index
      %c0_14 = arith.constant 0 : index
      %24 = vector.load %arg5[%c0_13, %c0_14] : memref<128x128xf32, #tpu.memory_space<vmem>>, vector<128x128xf32>
      %25 = arith.truncf %23 : vector<8x128xf32> to vector<8x128xbf16>
      %26 = arith.truncf %24 : vector<128x128xf32> to vector<128x128xbf16>
      %cst_15 = arith.constant dense<0.000000e+00> : vector<8x128xf32>
      %27 = tpu.matmul %25, %26, %cst_15 {dimension_numbers = #tpu.dot_dimension_numbers<[1], [0], [0], [1], [0, 0, 1, 1], [], []>} : vector<8x128xbf16>, vector<128x128xbf16>, vector<8x128xf32> -> vector<8x128xf32>
      %c0_16 = arith.constant 0 : index
      %c0_17 = arith.constant 0 : index
      %28 = vector.load %arg6[%c0_16, %c0_17] : memref<8x128xf32, #tpu.memory_space<vmem>>, vector<8x128xf32>
      tpu.vector_store %arg6[%c0_16, %c0_17], %27 {strides = array<i32>} : memref<8x128xf32, #tpu.memory_space<vmem>>, vector<8x128xf32>,
    } else {
    }
    return
  }
  func.func @transform_0(%arg0: i32, %arg1: i32) -> (i32, i32) {
    %c0_i32 = arith.constant 0 : i32
    return %arg0, %arg1 : i32, i32
  }
  func.func @transform_1(%arg0: i32, %arg1: i32) -> (i32, i32) {
    %c0_i32 = arith.constant 0 : i32
    %c0_i32_0 = arith.constant 0 : i32
    %c0_i32_1 = arith.constant 0 : i32
    return %c0_i32, %c0_i32_0 : i32, i32
  }
  func.func @transform_2(%arg0: i32, %arg1: i32) -> (i32, i32, i32) {
    %c0_i32 = arith.constant 0 : i32
    %c0_i32_0 = arith.constant 0 : i32
    %c0_i32_1 = arith.constant 0 : i32
    %c0_i32_2 = arith.constant 0 : i32
    return %c0_i32, %c0_i32_0, %c0_i32_1 : i32, i32, i32
  }
  func.func @transform_3(%arg0: i32, %arg1: i32) -> (i32, i32) {
    %c0_i32 = arith.constant 0 : i32
    %c0_i32_0 = arith.constant 0 : i32
    %c0_i32_1 = arith.constant 0 : i32
    return %c0_i32, %c0_i32_0 : i32, i32
  }
  func.func @transform_4(%arg0: i32, %arg1: i32) -> (i32, i32) {
    %c0_i32 = arith.constant 0 : i32
    %c0_i32_0 = arith.constant 0 : i32
    return %arg0, %c0_i32 : i32, i32
  }
}

</mosaic_0001>

<llo_original>
// kernel: simple_two_layer_net.1
$region0: #{simple_two_layer_net.1}
  #allocation0 [shape = 'u32[]', space=smem, size = 0x4, offset = 0x4, fixed_abs, tag = 'smem constant byte address 0x4 - core index']
  #allocation1 [shape = 'u32[144,128]{1,0:T(1,128)}', space=vmem, size = 0x12000, scoped, tag = 'internal scratch']
  #allocation2 [shape = 'f32[8,128]{1,0:T(8,128)}', space=vmem, size = 0x1000, scoped, tag = 'scratch operand']
  #allocation3 [shape = 'f32[8,1]{1,0:T(8,128)}', space=vmem, size = 0x1000, scoped, tag = 'scratch operand']
  %s0 = inlined_call_operand.vmem [shape: f32[8,1024], index: 0, kind: input, shape index: {}]
  %s1 = inlined_call_operand.vmem [shape: f32[1,128], index: 1, kind: input, shape index: {}]
  %s2 = inlined_call_operand.vmem [shape: f32[2,128,512], index: 2, kind: input, shape index: {}]
  %s3 = inlined_call_operand.vmem [shape: f32[128,128], index: 3, kind: input, shape index: {}]
  %s4 = inlined_call_operand.vmem [shape: f32[8,128], index: 4, kind: output, shape index: {}]
  %s5 = sld [smem:[#allocation0]]
  $region57: #{simple_two_layer_net.1} parent=0
    _
  %s7 = ssub.s32 1, %s5
  %s8 = scalar_select 0, %s7, %s5
  loop: start=0, step=1, limit=4
  $region2: #{simple_two_layer_net.1} parent=0 // loop_pre_header
    _
  $region3: #{simple_two_layer_net.1} parent=0 // loop_header
    %s10 = sphi 0, %s14
    %p11 = scmp.ge.s32.totalorder %s10, 4
    %s17 = sphi 0, %s29
    %s18 = sphi 0, %s25
    %s19 = sphi 0, %s17
    %s20 = sphi 0, %s18
    %s21 = sphi 0, %s19
    %s22 = sphi 0, %s20
    %s34 = sphi 0, %s36
    %s37 = sphi 0, %s34
    %s38 = sphi 0, %s37
    %s54 = sphi 0, %s38
    %s58 = sphi 0, %s58
    %s60 = sphi 0, %s58
    %s61 = sphi 0, %s60
    %s75 = sphi 0, %s61
    %s79 = sphi 0, %s79
    %s81 = sphi 0, %s79
    %s82 = sphi 0, %s81
    %s96 = sphi 0, %s82
    %s100 = sphi 0, %s100
    %s102 = sphi 0, %s100
    %s103 = sphi 0, %s102
    %s117 = sphi 0, %s103
    %s123 = sphi 0, %s125
    %s126 = sphi 0, %s123
    %s127 = sphi 0, %s126
    %s143 = sphi 0, %s127
  $region4: #{simple_two_layer_net.1} parent=0 // loop_header_branch
    %13 = sbr.rel (%p11) target = $region8
  $region5: #{simple_two_layer_net.1} parent=0 // loop_body
    %s15 = ssub.s32 %s10, 1
    %s16 = ssub.s32 %s10, 2
    %s23 = sadd.s32 1, %s18
    %p24 = scmp.ge.s32.totalorder %s23, 2
    %s25 = scalar_select %p24, 0, %s23
    %s26 = sadd.s32 1, %s17
    %s27 = scalar_select %p24, %s26, %s17
    %p28 = scmp.ge.s32.totalorder %s27, 1
    %s29 = scalar_select %p28, 0, %s27
    %s30 = ssub.s32 %s17, %s29
    %s31 = ssub.s32 %s18, %s25
    %s32 = sor.u32 %s30, %s31
    %p33 = scmp.eq.s32.totalorder %s32, 0
    %s35 = sadd.s32 %s34, 1
    %s36 = scalar_select %p33, %s34, %s35
    %p39 = pneg %p33
    %p40 = scmp.eq.s32.totalorder %s10, 1
    %p41 = por %p39, %p40
    %p42 = scmp.ne.s32.totalorder %s34, %s37
    %p43 = scmp.eq.s32.totalorder %s10, 0
    %p44 = por %p42, %p43
    %p45 = scmp.ne.s32.totalorder %s34, %s37
    %p46 = scmp.eq.s32.totalorder %s15, 1
    %p47 = por %p45, %p46
    %p48 = scmp.ne.s32.totalorder %s37, %s38
    %p49 = scmp.eq.s32.totalorder %s15, 0
    %p50 = por %p48, %p49
    %p51 = scmp.ne.s32.totalorder %s37, %s38
    %p52 = scmp.eq.s32.totalorder %s16, 1
    %p53 = por %p51, %p52
    %p55 = scmp.ne.s32.totalorder %s38, %s54
    %p56 = scmp.eq.s32.totalorder %s16, 0
    %p57 = por %p55, %p56
    %s59 = sadd.s32 %s58, 1
    %p62 = scmp.eq.s32.totalorder %s10, 1
    %p63 = scmp.ne.s32.totalorder %s58, %s60
    %p64 = scmp.eq.s32.totalorder %s10, 0
    %p65 = por %p63, %p64
    %p66 = scmp.ne.s32.totalorder %s58, %s60
    %p67 = scmp.eq.s32.totalorder %s15, 1
    %p68 = por %p66, %p67
    %p69 = scmp.ne.s32.totalorder %s60, %s61
    %p70 = scmp.eq.s32.totalorder %s15, 0
    %p71 = por %p69, %p70
    %p72 = scmp.ne.s32.totalorder %s60, %s61
    %p73 = scmp.eq.s32.totalorder %s16, 1
    %p74 = por %p72, %p73
    %p76 = scmp.ne.s32.totalorder %s61, %s75
    %p77 = scmp.eq.s32.totalorder %s16, 0
    %p78 = por %p76, %p77
    %s80 = sadd.s32 %s79, 1
    %p83 = scmp.eq.s32.totalorder %s10, 1
    %p84 = scmp.ne.s32.totalorder %s79, %s81
    %p85 = scmp.eq.s32.totalorder %s10, 0
    %p86 = por %p84, %p85
    %p87 = scmp.ne.s32.totalorder %s79, %s81
    %p88 = scmp.eq.s32.totalorder %s15, 1
    %p89 = por %p87, %p88
    %p90 = scmp.ne.s32.totalorder %s81, %s82
    %p91 = scmp.eq.s32.totalorder %s15, 0
    %p92 = por %p90, %p91
    %p93 = scmp.ne.s32.totalorder %s81, %s82
    %p94 = scmp.eq.s32.totalorder %s16, 1
    %p95 = por %p93, %p94
    %p97 = scmp.ne.s32.totalorder %s82, %s96
    %p98 = scmp.eq.s32.totalorder %s16, 0
    %p99 = por %p97, %p98
    %s101 = sadd.s32 %s100, 1
    %p104 = scmp.eq.s32.totalorder %s10, 1
    %p105 = scmp.ne.s32.totalorder %s100, %s102
    %p106 = scmp.eq.s32.totalorder %s10, 0
    %p107 = por %p105, %p106
    %p108 = scmp.ne.s32.totalorder %s100, %s102
    %p109 = scmp.eq.s32.totalorder %s15, 1
    %p110 = por %p108, %p109
    %p111 = scmp.ne.s32.totalorder %s102, %s103
    %p112 = scmp.eq.s32.totalorder %s15, 0
    %p113 = por %p111, %p112
    %p114 = scmp.ne.s32.totalorder %s102, %s103
    %p115 = scmp.eq.s32.totalorder %s16, 1
    %p116 = por %p114, %p115
    %p118 = scmp.ne.s32.totalorder %s103, %s117
    %p119 = scmp.eq.s32.totalorder %s16, 0
    %p120 = por %p118, %p119
    %s121 = ssub.s32 %s17, %s29
    %p122 = scmp.eq.s32.totalorder %s121, 0
    %s124 = sadd.s32 %s123, 1
    %s125 = scalar_select %p122, %s123, %s124
    %p128 = pneg %p122
    %p129 = scmp.eq.s32.totalorder %s10, 1
    %p130 = por %p128, %p129
    %p131 = scmp.ne.s32.totalorder %s123, %s126
    %p132 = scmp.eq.s32.totalorder %s10, 0
    %p133 = por %p131, %p132
    %p134 = scmp.ne.s32.totalorder %s123, %s126
    %p135 = scmp.eq.s32.totalorder %s15, 1
    %p136 = por %p134, %p135
    %p137 = scmp.ne.s32.totalorder %s126, %s127
    %p138 = scmp.eq.s32.totalorder %s15, 0
    %p139 = por %p137, %p138
    %p140 = scmp.ne.s32.totalorder %s126, %s127
    %p141 = scmp.eq.s32.totalorder %s16, 1
    %p142 = por %p140, %p141
    %p144 = scmp.ne.s32.totalorder %s127, %s143
    %p145 = scmp.eq.s32.totalorder %s16, 0
    %p146 = por %p144, %p145
    %p147 = scmp.le.s32.totalorder 1, %s10
    %p148 = scmp.lt.s32.totalorder %s10, 3
    %p149 = pnand %p147, %p148
    %p150 = pneg %p149
    // Predicated region
    $region9: #{simple_two_layer_net.1} parent=5 // pred_check
      _
    $region10: #{simple_two_layer_net.1} parent=5 // pred_check_branch
      %152 = sbr.rel (%p149) target = $region12
    $region11: #{simple_two_layer_net.1} parent=5 // pred_region
      %s153 = ssub.s32 %s10, 1
      // Predicated region
      $region13: #{simple_two_layer_net.1} parent=11 // pred_check
        %p154 = pneg %p71
      $region14: #{simple_two_layer_net.1} parent=11 // pred_check_branch
        %156 = sbr.rel (%p154) target = $region16
      $region15: #{simple_two_layer_net.1} parent=11 // pred_region
        _
      $region16: #{simple_two_layer_net.1} parent=11 // pred_fallthru
        _
      // Predicated region
      $region17: #{simple_two_layer_net.1} parent=11 // pred_check
        %p157 = pneg %p92
      $region18: #{simple_two_layer_net.1} parent=11 // pred_check_branch
        %159 = sbr.rel (%p157) target = $region20
      $region19: #{simple_two_layer_net.1} parent=11 // pred_region
        _
      $region20: #{simple_two_layer_net.1} parent=11 // pred_fallthru
        _
      // Predicated region
      $region21: #{simple_two_layer_net.1} parent=11 // pred_check
        %p160 = pneg %p113
      $region22: #{simple_two_layer_net.1} parent=11 // pred_check_branch
        %162 = sbr.rel (%p160) target = $region24
      $region23: #{simple_two_layer_net.1} parent=11 // pred_region
        _
      $region24: #{simple_two_layer_net.1} parent=11 // pred_fallthru
        _
    $region12: #{simple_two_layer_net.1} parent=5 // pred_fallthru
      _
    %p163 = scmp.lt.s32.totalorder %s10, 2
    // Predicated region
    $region25: #{simple_two_layer_net.1} parent=5 // pred_check
      %p164 = pneg %p163
    $region26: #{simple_two_layer_net.1} parent=5 // pred_check_branch
      %166 = sbr.rel (%p164) target = $region28
    $region27: #{simple_two_layer_net.1} parent=5 // pred_region
      // Predicated region
      $region29: #{simple_two_layer_net.1} parent=27 // pred_check
        %p167 = pneg %p44
      $region30: #{simple_two_layer_net.1} parent=27 // pred_check_branch
        %169 = sbr.rel (%p167) target = $region32
      $region31: #{simple_two_layer_net.1} parent=27 // pred_region
        %s170 = smul.u32 4, %s18
        %p171 = scmp.lt.s32.totalorder %s17, 0
        %s172 = scalar_select %p171, %s17, 0
        %p173 = scmp.lt.s32.totalorder %s170, 7
        %s174 = scalar_select %p173, %s170, 7
        %s175 = smul.addr %s172, 8
        %s176 = sadd.s32 %s174, %s175
        %s177 = smul.addr %s176, 8
        %s178 = scalar_lea.vmem %s0, %s177
        %s179 = smul.u32 4, %s18
      $region32: #{simple_two_layer_net.1} parent=27 // pred_fallthru
        _
    $region28: #{simple_two_layer_net.1} parent=5 // pred_fallthru
      _
    %p180 = scmp.le.s32.totalorder 1, %s10
    %p181 = scmp.lt.s32.totalorder %s10, 3
    %p182 = pnand %p180, %p181
    %p183 = pneg %p182
    // Predicated region
    $region33: #{simple_two_layer_net.1} parent=5 // pred_check
      _
    $region34: #{simple_two_layer_net.1} parent=5 // pred_check_branch
      %185 = sbr.rel (%p182) target = $region36
    $region35: #{simple_two_layer_net.1} parent=5 // pred_region
      %s186 = ssub.s32 %s10, 1
      %s187 = smul.u32 4, %s20
      %p188 = scmp.lt.s32.totalorder %s19, 0
      %s189 = scalar_select %p188, %s19, 0
      %p190 = scmp.lt.s32.totalorder %s187, 7
      %s191 = scalar_select %p190, %s187, 7
      %s192 = smul.addr %s189, 8
      %s193 = sadd.s32 %s191, %s192
      %s194 = smul.addr %s193, 8
      %s195 = scalar_lea.vmem %s0, %s194
      %p196 = pneg %p50
      %p197 = pneg %p47
      %p198 = pneg %p71
      %p199 = pneg %p68
      %p200 = pneg %p92
      %p201 = pneg %p89
      %p202 = pneg %p113
      %p203 = pneg %p110
      %p204 = pneg %p139
      %p205 = pneg %p136
      %p206 = scmp.lt.s32.totalorder %s19, 0
      %s207 = scalar_select %p206, %s19, 0
      %s208 = smul.addr %s207, 8
      %s209 = scalar_lea.vmem %s4, %s208
      %s210 = smul.u32 4, %s20
      %p211 = scmp.lt.s32.totalorder %s19, 0
      %s212 = scalar_select %p211, %s19, 0
      %p213 = scmp.lt.s32.totalorder %s210, 7
      %s214 = scalar_select %p213, %s210, 7
      %s215 = smul.addr %s212, 8
      %s216 = sadd.s32 %s214, %s215
      %s217 = smul.addr %s216, 8
      %s218 = scalar_lea.vmem %s0, %s217
      %s219 = smul.u32 4, %s20
      %p220 = scmp.lt.s32.totalorder %s19, 0
      %s221 = scalar_select %p220, %s19, 0
      %s222 = smul.addr %s221, 8
      %s223 = scalar_lea.vmem %s4, %s222
      %p225 = scmp.eq.s32.totalorder %s20, 0
      // Predicated region
      $region37: #{simple_two_layer_net.1} parent=35 // pred_check
        %p226 = pneg %p225
      $region38: #{simple_two_layer_net.1} parent=35 // pred_check_branch
        %228 = sbr.rel (%p226) target = $region40
      $region39: #{simple_two_layer_net.1} parent=35 // pred_region
        %229 = vst [vmem:[#allocation2] sm:$0xff] 0.0
      $region40: #{simple_two_layer_net.1} parent=35 // pred_fallthru
        _
      %v230 = vld [vmem:[%s218] sm:$0xff]
      %v231 = vld [vmem:[%s218 + $0x8] sm:$0xff]
      %v232 = vld [vmem:[%s218 + $0x10] sm:$0xff]
      %v233 = vld [vmem:[%s218 + $0x18] sm:$0xff]
      %s234 = smul.u32 %s20, 64
      %s235 = smul.addr %s234, 8
      %s236 = scalar_lea.vmem %s2, %s235
      %v237 = vld [vmem:[%s236] sm:$0xff]
      %v238 = vld [vmem:[%s236 + $0x8] sm:$0xff]
      %v239 = vld [vmem:[%s236 + $0x10] sm:$0xff]
      %v240 = vld [vmem:[%s236 + $0x18] sm:$0xff]
      %v241 = vld [vmem:[%s236 + $0x20] sm:$0xff]
      %v242 = vld [vmem:[%s236 + $0x28] sm:$0xff]
      %v243 = vld [vmem:[%s236 + $0x30] sm:$0xff]
      %v244 = vld [vmem:[%s236 + $0x38] sm:$0xff]
      %v245 = vld [vmem:[%s236 + $0x40] sm:$0xff]
      %v246 = vld [vmem:[%s236 + $0x48] sm:$0xff]
      %v247 = vld [vmem:[%s236 + $0x50] sm:$0xff]
      %v248 = vld [vmem:[%s236 + $0x58] sm:$0xff]
      %v249 = vld [vmem:[%s236 + $0x60] sm:$0xff]
      %v250 = vld [vmem:[%s236 + $0x68] sm:$0xff]
      %v251 = vld [vmem:[%s236 + $0x70] sm:$0xff]
      %v252 = vld [vmem:[%s236 + $0x78] sm:$0xff]
      %v253 = vld [vmem:[%s236 + $0x80] sm:$0xff]
      %v254 = vld [vmem:[%s236 + $0x88] sm:$0xff]
      %v255 = vld [vmem:[%s236 + $0x90] sm:$0xff]
      %v256 = vld [vmem:[%s236 + $0x98] sm:$0xff]
      %v257 = vld [vmem:[%s236 + $0xa0] sm:$0xff]
      %v258 = vld [vmem:[%s236 + $0xa8] sm:$0xff]
      %v259 = vld [vmem:[%s236 + $0xb0] sm:$0xff]
      %v260 = vld [vmem:[%s236 + $0xb8] sm:$0xff]
      %v261 = vld [vmem:[%s236 + $0xc0] sm:$0xff]
      %v262 = vld [vmem:[%s236 + $0xc8] sm:$0xff]
      %v263 = vld [vmem:[%s236 + $0xd0] sm:$0xff]
      %v264 = vld [vmem:[%s236 + $0xd8] sm:$0xff]
      %v265 = vld [vmem:[%s236 + $0xe0] sm:$0xff]
      %v266 = vld [vmem:[%s236 + $0xe8] sm:$0xff]
      %v267 = vld [vmem:[%s236 + $0xf0] sm:$0xff]
      %v268 = vld [vmem:[%s236 + $0xf8] sm:$0xff]
      %v269 = vld [vmem:[%s236 + $0x100] sm:$0xff]
      %v270 = vld [vmem:[%s236 + $0x108] sm:$0xff]
      %v271 = vld [vmem:[%s236 + $0x110] sm:$0xff]
      %v272 = vld [vmem:[%s236 + $0x118] sm:$0xff]
      %v273 = vld [vmem:[%s236 + $0x120] sm:$0xff]
      %v274 = vld [vmem:[%s236 + $0x128] sm:$0xff]
      %v275 = vld [vmem:[%s236 + $0x130] sm:$0xff]
      %v276 = vld [vmem:[%s236 + $0x138] sm:$0xff]
      %v277 = vld [vmem:[%s236 + $0x140] sm:$0xff]
      %v278 = vld [vmem:[%s236 + $0x148] sm:$0xff]
      %v279 = vld [vmem:[%s236 + $0x150] sm:$0xff]
      %v280 = vld [vmem:[%s236 + $0x158] sm:$0xff]
      %v281 = vld [vmem:[%s236 + $0x160] sm:$0xff]
      %v282 = vld [vmem:[%s236 + $0x168] sm:$0xff]
      %v283 = vld [vmem:[%s236 + $0x170] sm:$0xff]
      %v284 = vld [vmem:[%s236 + $0x178] sm:$0xff]
      %v285 = vld [vmem:[%s236 + $0x180] sm:$0xff]
      %v286 = vld [vmem:[%s236 + $0x188] sm:$0xff]
      %v287 = vld [vmem:[%s236 + $0x190] sm:$0xff]
      %v288 = vld [vmem:[%s236 + $0x198] sm:$0xff]
      %v289 = vld [vmem:[%s236 + $0x1a0] sm:$0xff]
      %v290 = vld [vmem:[%s236 + $0x1a8] sm:$0xff]
      %v291 = vld [vmem:[%s236 + $0x1b0] sm:$0xff]
      %v292 = vld [vmem:[%s236 + $0x1b8] sm:$0xff]
      %v293 = vld [vmem:[%s236 + $0x1c0] sm:$0xff]
      %v294 = vld [vmem:[%s236 + $0x1c8] sm:$0xff]
      %v295 = vld [vmem:[%s236 + $0x1d0] sm:$0xff]
      %v296 = vld [vmem:[%s236 + $0x1d8] sm:$0xff]
      %v297 = vld [vmem:[%s236 + $0x1e0] sm:$0xff]
      %v298 = vld [vmem:[%s236 + $0x1e8] sm:$0xff]
      %v299 = vld [vmem:[%s236 + $0x1f0] sm:$0xff]
      %v300 = vld [vmem:[%s236 + $0x1f8] sm:$0xff]
      %v301 = vld [vmem:[#allocation2] sm:$0xff]
      %v302 = vpack.c.bf16 %v230, %v230
      %v303 = vpack.c.bf16 %v231, %v231
      %v304 = vpack.c.bf16 %v232, %v232
      %v305 = vpack.c.bf16 %v233, %v233
      %v306 = vpack.c.bf16 %v241, %v237
      %v307 = vpack.c.bf16 %v242, %v238
      %v308 = vpack.c.bf16 %v243, %v239
      %v309 = vpack.c.bf16 %v244, %v240
      %v310 = vpack.c.bf16 %v249, %v245
      %v311 = vpack.c.bf16 %v250, %v246
      %v312 = vpack.c.bf16 %v251, %v247
      %v313 = vpack.c.bf16 %v252, %v248
      %v314 = vpack.c.bf16 %v257, %v253
      %v315 = vpack.c.bf16 %v258, %v254
      %v316 = vpack.c.bf16 %v259, %v255
      %v317 = vpack.c.bf16 %v260, %v256
      %v318 = vpack.c.bf16 %v265, %v261
      %v319 = vpack.c.bf16 %v266, %v262
      %v320 = vpack.c.bf16 %v267, %v263
      %v321 = vpack.c.bf16 %v268, %v264
      %v322 = vpack.c.bf16 %v273, %v269
      %v323 = vpack.c.bf16 %v274, %v270
      %v324 = vpack.c.bf16 %v275, %v271
      %v325 = vpack.c.bf16 %v276, %v272
      %v326 = vpack.c.bf16 %v281, %v277
      %v327 = vpack.c.bf16 %v282, %v278
      %v328 = vpack.c.bf16 %v283, %v279
      %v329 = vpack.c.bf16 %v284, %v280
      %v330 = vpack.c.bf16 %v289, %v285
      %v331 = vpack.c.bf16 %v290, %v286
      %v332 = vpack.c.bf16 %v291, %v287
      %v333 = vpack.c.bf16 %v292, %v288
      %v334 = vpack.c.bf16 %v297, %v293
      %v335 = vpack.c.bf16 %v298, %v294
      %v336 = vpack.c.bf16 %v299, %v295
      %v337 = vpack.c.bf16 %v300, %v296
      %338 = vmatprep.subr.bf16.mxu0 %v335
      %339 = vmatpush1.bf16.xpose.msra.mxu0 %v334
      %340 = vmatprep.subr.bf16.mxu0 %v331
      %341 = vmatpush1.bf16.xpose.msra.mxu0 %v330
      %342 = vmatprep.subr.bf16.mxu0 %v327
      %343 = vmatpush1.bf16.xpose.msra.mxu0 %v326
      %344 = vmatprep.subr.bf16.mxu0 %v323
      %345 = vmatpush1.bf16.xpose.msra.mxu0 %v322
      %346 = vmatprep.subr.bf16.mxu0 %v319
      %347 = vmatpush1.bf16.xpose.msra.mxu0 %v318
      %348 = vmatprep.subr.bf16.mxu0 %v315
      %349 = vmatpush1.bf16.xpose.msra.mxu0 %v314
      %350 = vmatprep.subr.bf16.mxu0 %v311
      %351 = vmatpush1.bf16.xpose.msra.mxu0 %v310
      %352 = vmatprep.subr.bf16.mxu0 %v307
      %353 = vmatpush1.bf16.xpose.msra.mxu0 %v306
      %354 = vmatprep.subr.bf16.mxu0 0
      %355 = vmatpush2.bf16.xpose.msra.mxu0 0
      %356 = vmatprep.subr.bf16.mxu0 0
      %357 = vmatpush2.bf16.xpose.msra.mxu0 0
      %358 = vmatprep.subr.bf16.mxu0 0
      %359 = vmatpush2.bf16.xpose.msra.mxu0 0
      %360 = vmatprep.subr.bf16.mxu0 0
      %361 = vmatpush2.bf16.xpose.msra.mxu0 0
      %362 = vmatprep.subr.bf16.mxu0 0
      %363 = vmatpush2.bf16.xpose.msra.mxu0 0
      %364 = vmatprep.subr.bf16.mxu0 0
      %365 = vmatpush2.bf16.xpose.msra.mxu0 0
      %366 = vmatprep.subr.bf16.mxu0 0
      %367 = vmatpush2.bf16.xpose.msra.mxu0 0
      %368 = vmatprep.subr.bf16.mxu0 0
      %369 = vmatpush2.bf16.xpose.msra.mxu0 0
      %370 = vmatprep.mubr.bf16.mxu0 %v303
      %371 = vmatmul.mubr.bf16.gmra.mxu0 %v302
      %v372 = vpop.f32.mrf.mxu0
      %v373 = vadd.f32 0.0, %v372
      %v374 = vpop.f32.mrf.mxu0
      %v375 = vpop.f32.mrf.mxu0
      %v376 = vpop.f32.mrf.mxu0
      %377 = vdwg.mxu0
      %378 = vmatprep.subr.bf16.mxu0 %v337
      %379 = vmatpush1.bf16.xpose.msra.mxu0 %v336
      %380 = vmatprep.subr.bf16.mxu0 %v333
      %381 = vmatpush1.bf16.xpose.msra.mxu0 %v332
      %382 = vmatprep.subr.bf16.mxu0 %v329
      %383 = vmatpush1.bf16.xpose.msra.mxu0 %v328
      %384 = vmatprep.subr.bf16.mxu0 %v325
      %385 = vmatpush1.bf16.xpose.msra.mxu0 %v324
      %386 = vmatprep.subr.bf16.mxu0 %v321
      %387 = vmatpush1.bf16.xpose.msra.mxu0 %v320
      %388 = vmatprep.subr.bf16.mxu0 %v317
      %389 = vmatpush1.bf16.xpose.msra.mxu0 %v316
      %390 = vmatprep.subr.bf16.mxu0 %v313
      %391 = vmatpush1.bf16.xpose.msra.mxu0 %v312
      %392 = vmatprep.subr.bf16.mxu0 %v309
      %393 = vmatpush1.bf16.xpose.msra.mxu0 %v308
      %394 = vmatprep.subr.bf16.mxu0 0
      %395 = vmatpush2.bf16.xpose.msra.mxu0 0
      %396 = vmatprep.subr.bf16.mxu0 0
      %397 = vmatpush2.bf16.xpose.msra.mxu0 0
      %398 = vmatprep.subr.bf16.mxu0 0
      %399 = vmatpush2.bf16.xpose.msra.mxu0 0
      %400 = vmatprep.subr.bf16.mxu0 0
      %401 = vmatpush2.bf16.xpose.msra.mxu0 0
      %402 = vmatprep.subr.bf16.mxu0 0
      %403 = vmatpush2.bf16.xpose.msra.mxu0 0
      %404 = vmatprep.subr.bf16.mxu0 0
      %405 = vmatpush2.bf16.xpose.msra.mxu0 0
      %406 = vmatprep.subr.bf16.mxu0 0
      %407 = vmatpush2.bf16.xpose.msra.mxu0 0
      %408 = vmatprep.subr.bf16.mxu0 0
      %409 = vmatpush2.bf16.xpose.msra.mxu0 0
      %410 = vmatprep.mubr.bf16.mxu0 %v305
      %411 = vmatmul.mubr.bf16.gmra.mxu0 %v304
      %v412 = vpop.f32.mrf.mxu0
      %v413 = vadd.f32 %v373, %v412
      %v414 = vpop.f32.mrf.mxu0
      %v415 = vpop.f32.mrf.mxu0
      %v416 = vpop.f32.mrf.mxu0
      %417 = vdwg.mxu0
      %v418 = vadd.f32 %v301, %v413
      %419 = vst [vmem:[#allocation2] sm:$0xff] %v418
      %p420 = scmp.eq.s32.totalorder %s20, 1
      // Predicated region
      $region41: #{simple_two_layer_net.1} parent=35 // pred_check
        %p421 = pneg %p420
      $region42: #{simple_two_layer_net.1} parent=35 // pred_check_branch
        %423 = sbr.rel (%p421) target = $region44
      $region43: #{simple_two_layer_net.1} parent=35 // pred_region
        %v424 = vld [vmem:[#allocation2] sm:$0xff]
        %v425 = vlaneseq
        %v426 = vand.u32 %v425, 127
        %vm427 = vcmp.lt.s32.totalorder %v426, 32
        %v428 = vmax.f32 %v424, 0.0
        %v429 = vsel %vm427, %v428, 0.0
        %v430 = vld [vmem:[%s3] sm:$0xff]
        %v431 = vld [vmem:[%s3 + $0x8] sm:$0xff]
        %v432 = vld [vmem:[%s3 + $0x10] sm:$0xff]
        %v433 = vld [vmem:[%s3 + $0x18] sm:$0xff]
        %v434 = vld [vmem:[%s3 + $0x20] sm:$0xff]
        %v435 = vld [vmem:[%s3 + $0x28] sm:$0xff]
        %v436 = vld [vmem:[%s3 + $0x30] sm:$0xff]
        %v437 = vld [vmem:[%s3 + $0x38] sm:$0xff]
        %v438 = vld [vmem:[%s3 + $0x40] sm:$0xff]
        %v439 = vld [vmem:[%s3 + $0x48] sm:$0xff]
        %v440 = vld [vmem:[%s3 + $0x50] sm:$0xff]
        %v441 = vld [vmem:[%s3 + $0x58] sm:$0xff]
        %v442 = vld [vmem:[%s3 + $0x60] sm:$0xff]
        %v443 = vld [vmem:[%s3 + $0x68] sm:$0xff]
        %v444 = vld [vmem:[%s3 + $0x70] sm:$0xff]
        %v445 = vld [vmem:[%s3 + $0x78] sm:$0xff]
        %v446 = vpack.c.bf16 %v429, %v429
        %v447 = vpack.c.bf16 %v431, %v430
        %v448 = vpack.c.bf16 %v433, %v432
        %v449 = vpack.c.bf16 %v435, %v434
        %v450 = vpack.c.bf16 %v437, %v436
        %v451 = vpack.c.bf16 %v439, %v438
        %v452 = vpack.c.bf16 %v441, %v440
        %v453 = vpack.c.bf16 %v443, %v442
        %v454 = vpack.c.bf16 %v445, %v444
        %455 = vmatprep.subr.bf16.mxu0 0
        %456 = vmatpush1.bf16.msra.mxu0 %v454
        %457 = vmatprep.subr.bf16.mxu0 0
        %458 = vmatpush1.bf16.msra.mxu0 %v453
        %459 = vmatprep.subr.bf16.mxu0 0
        %460 = vmatpush1.bf16.msra.mxu0 %v452
        %461 = vmatprep.subr.bf16.mxu0 0
        %462 = vmatpush1.bf16.msra.mxu0 %v451
        %463 = vmatprep.subr.bf16.mxu0 0
        %464 = vmatpush1.bf16.msra.mxu0 %v450
        %465 = vmatprep.subr.bf16.mxu0 0
        %466 = vmatpush1.bf16.msra.mxu0 %v449
        %467 = vmatprep.subr.bf16.mxu0 0
        %468 = vmatpush1.bf16.msra.mxu0 %v448
        %469 = vmatprep.subr.bf16.mxu0 0
        %470 = vmatpush1.bf16.msra.mxu0 %v447
        %471 = vmatprep.subr.bf16.mxu0 0
        %472 = vmatpush2.bf16.msra.mxu0 0
        %473 = vmatprep.subr.bf16.mxu0 0
        %474 = vmatpush2.bf16.msra.mxu0 0
        %475 = vmatprep.subr.bf16.mxu0 0
        %476 = vmatpush2.bf16.msra.mxu0 0
        %477 = vmatprep.subr.bf16.mxu0 0
        %478 = vmatpush2.bf16.msra.mxu0 0
        %479 = vmatprep.subr.bf16.mxu0 0
        %480 = vmatpush2.bf16.msra.mxu0 0
        %481 = vmatprep.subr.bf16.mxu0 0
        %482 = vmatpush2.bf16.msra.mxu0 0
        %483 = vmatprep.subr.bf16.mxu0 0
        %484 = vmatpush2.bf16.msra.mxu0 0
        %485 = vmatprep.subr.bf16.mxu0 0
        %486 = vmatpush2.bf16.msra.mxu0 0
        %487 = vmatprep.mubr.bf16.mxu0 0
        %488 = vmatmul.mubr.bf16.gmra.mxu0 %v446
        %v489 = vpop.f32.mrf.mxu0
        %v490 = vadd.f32 0.0, %v489
        %v491 = vpop.f32.mrf.mxu0
        %v492 = vpop.f32.mrf.mxu0
        %v493 = vpop.f32.mrf.mxu0
        %494 = vdwg.mxu0
        %495 = vst [vmem:[%s223] sm:$0xff] %v490
      $region44: #{simple_two_layer_net.1} parent=35 // pred_fallthru
        _
      %p496 = scmp.lt.s32.totalorder %s19, 0
      %s497 = scalar_select %p496, %s19, 0
      %s498 = smul.addr %s497, 8
      %s499 = scalar_lea.vmem %s4, %s498
      // Predicated region
      $region45: #{simple_two_layer_net.1} parent=35 // pred_check
        %p500 = pneg %p136
      $region46: #{simple_two_layer_net.1} parent=35 // pred_check_branch
        %502 = sbr.rel (%p500) target = $region48
      $region47: #{simple_two_layer_net.1} parent=35 // pred_region
        _
      $region48: #{simple_two_layer_net.1} parent=35 // pred_fallthru
        _
      // Predicated region
      $region49: #{simple_two_layer_net.1} parent=35 // pred_check
        %p503 = pneg %p136
      $region50: #{simple_two_layer_net.1} parent=35 // pred_check_branch
        %505 = sbr.rel (%p503) target = $region52
      $region51: #{simple_two_layer_net.1} parent=35 // pred_region
        %p506 = scmp.lt.s32.totalorder %s19, 0
        %s507 = scalar_select %p506, %s19, 0
        %s508 = smul.addr %s507, 8
        %s509 = scalar_lea.vmem %s4, %s508
      $region52: #{simple_two_layer_net.1} parent=35 // pred_fallthru
        _
    $region36: #{simple_two_layer_net.1} parent=5 // pred_fallthru
      _
    %p510 = scmp.le.s32.totalorder 2, %s10
    // Predicated region
    $region53: #{simple_two_layer_net.1} parent=5 // pred_check
      %p511 = pneg %p510
    $region54: #{simple_two_layer_net.1} parent=5 // pred_check_branch
      %513 = sbr.rel (%p511) target = $region56
    $region55: #{simple_two_layer_net.1} parent=5 // pred_region
      %s514 = ssub.s32 %s10, 2
    $region56: #{simple_two_layer_net.1} parent=5 // pred_fallthru
      _
  $region6: #{simple_two_layer_net.1} parent=0 // loop_footer
    %s14 = sadd.s32 1, %s10
  $region7: #{simple_two_layer_net.1} parent=0 // loop_footer_branch
    %9 = sbr.rel target = $region3
  $region8: #{simple_two_layer_net.1} parent=0 // loop_exit
    _

</llo_original>
